<compile_context>
chip_gen: v5e
topology: v5e:2x2
jax: 0.10.0
libtpu: 0.0.40
codegen_flags: <defaults>
</compile_context>

<pallas_src>
import functools

import jax
import jax.numpy as jnp
from jax import lax
from jax.experimental import pallas as pl
from jax.experimental.pallas import tpu as pltpu

LANE = 128


def _round_up(x, m):
    return (x + m - 1) // m * m


def _vmem_capacity_bytes():
    # Generation-aware sizing (v5e/v6e: 128 MiB, v7x: 64 MiB per TensorCore).
    try:
        return int(pltpu.get_tpu_info().vmem_capacity_bytes)
    except Exception:
        return 64 * 1024 * 1024  # conservative fallback (v7x)


def _vmem_limit_bytes(vmem_cap):
    # ~96 MiB on v5e/v6e (128 MiB physical), ~48 MiB on v7x (64 MiB physical).
    return min(100 * 1024 * 1024, vmem_cap * 3 // 4)


# ----------------------------- fused path -----------------------------------

def _fused_kernel(a_ref, z1_ref, b1_ref, w2_ref, b2_ref, o_ref):
    a = a_ref[...]
    # Layer 1: h = relu(A @ (X W1) + b1); f32 MXU accumulation.
    h = jnp.dot(a, z1_ref[...], preferred_element_type=jnp.float32) + b1_ref[...]
    h = jnp.maximum(h, 0.0)
    # Layer 2: out = A @ (h W2) + b2, all operands VMEM-resident.
    z2 = jnp.dot(h.astype(w2_ref.dtype), w2_ref[...],
                 preferred_element_type=jnp.float32)
    out = jnp.dot(a, z2.astype(a.dtype), preferred_element_type=jnp.float32)
    o_ref[...] = (out + b2_ref[...]).astype(o_ref.dtype)


def _gcn_fused(a, z1, b1, w2, b2, *, vmem_limit):
    np_ = a.shape[0]
    hid = z1.shape[1]
    fout = w2.shape[1]
    return pl.pallas_call(
        _fused_kernel,
        out_shape=jax.ShapeDtypeStruct((np_, fout), jnp.float32),
        grid_spec=pltpu.PrefetchScalarGridSpec(
            num_scalar_prefetch=0,
            grid=(1,),
            in_specs=[
                pl.BlockSpec((np_, np_), lambda i: (0, 0)),   # A, resident
                pl.BlockSpec((np_, hid), lambda i: (0, 0)),   # Z1 = X @ W1
                pl.BlockSpec((1, hid), lambda i: (0, 0)),     # b1
                pl.BlockSpec((hid, fout), lambda i: (0, 0)),  # W2
                pl.BlockSpec((1, fout), lambda i: (0, 0)),    # b2
            ],
            out_specs=pl.BlockSpec((np_, fout), lambda i: (0, 0)),
        ),
        compiler_params=pltpu.CompilerParams(
            dimension_semantics=("arbitrary",),
            vmem_limit_bytes=vmem_limit,
        ),
    )(a, z1, b1, w2, b2)


# ------------------------- tiled per-layer path ------------------------------

def _layer_kernel(a_ref, z_ref, b_ref, o_ref, acc_ref, *, apply_relu):
    k = pl.program_id(1)

    @pl.when(k == 0)
    def _():
        acc_ref[...] = jnp.zeros_like(acc_ref)

    acc_ref[...] += jnp.dot(a_ref[...], z_ref[...],
                            preferred_element_type=jnp.float32)

    @pl.when(k == pl.num_programs(1) - 1)
    def _():
        out = acc_ref[...] + b_ref[...]
        if apply_relu:
            out = jnp.maximum(out, 0.0)
        o_ref[...] = out.astype(o_ref.dtype)


def _gcn_layer_tiled(a, z, b, *, apply_relu, out_dtype, block_m, block_k,
                     vmem_limit):
    """out = act(A @ Z + b) with row ("parallel") x contraction ("arbitrary") grid."""
    np_ = a.shape[0]
    f = z.shape[1]
    grid = (np_ // block_m, np_ // block_k)
    kernel = functools.partial(_layer_kernel, apply_relu=apply_relu)
    return pl.pallas_call(
        kernel,
        out_shape=jax.ShapeDtypeStruct((np_, f), out_dtype),
        grid_spec=pltpu.PrefetchScalarGridSpec(
            num_scalar_prefetch=0,
            grid=grid,
            in_specs=[
                pl.BlockSpec((block_m, block_k), lambda i, k: (i, k)),  # A tile
                pl.BlockSpec((block_k, f), lambda i, k: (k, 0)),        # Z tile
                pl.BlockSpec((1, f), lambda i, k: (0, 0)),              # bias
            ],
            out_specs=pl.BlockSpec((block_m, f), lambda i, k: (i, 0)),
            scratch_shapes=[pltpu.VMEM((block_m, f), jnp.float32)],
        ),
        compiler_params=pltpu.CompilerParams(
            dimension_semantics=("parallel", "arbitrary"),
            vmem_limit_bytes=vmem_limit,
        ),
    )(a, z, b)


def _pick_tiled_blocks(np_, vmem_cap):
    """Largest row/contraction tiles that fit a conservative VMEM budget.

    Bigger tiles amortize the ~0.35us per-grid-step overhead (HBM-bound kernel);
    budget keeps double-buffered A/Z tiles + f32 accumulator + output well
    inside the scoped VMEM limit of the current TPU generation.
    """
    budget = max(8 * 1024 * 1024, int(vmem_cap * 0.4))
    block_k = 512 if np_ % 512 == 0 else 128
    block_m = 128
    for bm in (1024, 512, 256, 128):
        if np_ % bm != 0:
            continue
        if np_ // bm < 2 and bm != np_:
            continue
        need = (2 * bm * block_k * 2          # double-buffered bf16 A tile
                + 2 * block_k * LANE * 2      # double-buffered bf16 Z tile
                + bm * LANE * 4               # f32 accumulator scratch
                + 2 * bm * LANE * 4)          # double-buffered output tile
        if need <= budget:
            block_m = bm
            break
    # Prefer >= 2 row blocks so the "parallel" axis can shard across v7x's 2 TCs.
    if np_ // block_m < 2 and block_m >= 256 and np_ % (block_m // 2) == 0:
        block_m //= 2
    return block_m, block_k


# ------------------------------- wrapper -------------------------------------

def normalized_adjacency_padded(edge_index, num_nodes, num_padded):
    """Dense D^{-1/2}(A+I)D^{-1/2} (PyG gcn_norm), built directly at padded size.

    Padded rows/cols have zero degree -> dinv = 0 -> they stay exactly zero.
    Duplicate edges are counted with multiplicity (matches PyG scatter-add).
    Kept in f32; only downcast to bf16 at the kernel boundary.
    """
    # TODO(synk): for large real graphs keep edge_index in SMEM
    # (PrefetchScalarGridSpec) and gather neighbor rows with make_async_copy
    # instead of densifying the O(N^2) adjacency.
    row, col = edge_index[0], edge_index[1]
    a = jnp.zeros((num_padded, num_padded), jnp.float32)
    a = a.at[col, row].add(1.0)          # aggregate x[row] into out[col]
    idx = jnp.arange(num_nodes)
    a = a.at[idx, idx].add(1.0)          # self loops for real nodes only
    deg = a.sum(axis=1)
    dinv = jnp.where(deg > 0, lax.rsqrt(deg), 0.0)
    return dinv[:, None] * a * dinv[None, :]


def gcn_encoder(x, edge_index, w1, b1, w2, b2, *, force_tiled=False):
    """GCNEncoder forward: relu(GCNConv(x)) -> GCNConv.  Returns [N, out]."""
    n, fin = x.shape
    hid = w1.shape[1]
    fout = w2.shape[1]
    np_ = _round_up(n, LANE)
    hid_p = _round_up(hid, LANE)
    fout_p = _round_up(fout, LANE)

    vmem_cap = _vmem_capacity_bytes()
    vmem_limit = _vmem_limit_bytes(vmem_cap)

    bf16 = jnp.bfloat16
    # One padded O(N^2) buffer (f32), one bf16 cast for the MXU / halved DMA.
    a_f32 = normalized_adjacency_padded(edge_index, n, np_)
    a_bf = a_f32.astype(bf16)

    # Hoisted dense feature transform (tiny, plain XLA): Z1 = X @ W1.
    z1 = jnp.dot(x, w1, preferred_element_type=jnp.float32)
    z1_p = jnp.zeros((np_, hid_p), bf16).at[:n, :hid].set(z1.astype(bf16))
    b1_p = jnp.zeros((1, hid_p), jnp.float32).at[:, :hid].set(b1)
    w2_p = jnp.zeros((hid_p, fout_p), bf16).at[:hid, :fout].set(w2.astype(bf16))
    b2_p = jnp.zeros((1, fout_p), jnp.float32).at[:, :fout].set(b2)

    # Fused single-call path when A + activations fit comfortably in VMEM.
    fused_bytes = np_ * np_ * 2 + np_ * LANE * 20 + (2 << 20)
    if not force_tiled and fused_bytes <= vmem_limit // 2:
        out_p = _gcn_fused(a_bf, z1_p, b1_p, w2_p, b2_p, vmem_limit=vmem_limit)
    else:
        block_m, block_k = _pick_tiled_blocks(np_, vmem_cap)
        # Layer 1: h = relu(A @ Z1 + b1); keep bf16 for layer-2 MXU/DMA.
        h = _gcn_layer_tiled(a_bf, z1_p, b1_p, apply_relu=True,
                             out_dtype=bf16, block_m=block_m, block_k=block_k,
                             vmem_limit=vmem_limit)
        # Hoisted layer-2 transform: Z2 = h @ W2 in XLA (padded h rows equal
        # relu(b1); harmless since A's padded columns are zero).
        z2 = jnp.dot(h, w2_p, preferred_element_type=jnp.float32).astype(bf16)
        # Layer 2: out = A @ Z2 + b2 (no relu).
        out_p = _gcn_layer_tiled(a_bf, z2, b2_p, apply_relu=False,
                                 out_dtype=jnp.float32, block_m=block_m,
                                 block_k=block_k, vmem_limit=vmem_limit)
    return out_p[:n, :fout]


def glorot(key, shape):
    limit = jnp.sqrt(6.0 / (shape[0] + shape[1]))
    return jax.random.uniform(key, shape, jnp.float32, -limit, limit)


if __name__ == "__main__":
    key = jax.random.PRNGKey(0)
    k_x, k_e1, k_e2, k_w1, k_w2 = jax.random.split(key, 5)

    num_nodes = 64
    in_channels = 16
    out_channels = 16          # GCNEncoder(in_channels=16, out_channels=16)
    hidden = 2 * out_channels  # conv1 output width
    num_edges = 256

    # Node features [N, Fin]
    x = jax.random.normal(k_x, (num_nodes, in_channels), jnp.float32)

    # Deterministic random graph (no self loops; GCNConv adds them itself)
    src = jax.random.randint(k_e1, (num_edges,), 0, num_nodes, jnp.int32)
    off = jax.random.randint(k_e2, (num_edges,), 1, num_nodes, jnp.int32)
    dst = (src + off) % num_nodes
    edge_index = jnp.stack([src, dst], axis=0)

    # GCNConv parameters (PyG lin.weight is [out,in]; stored transposed here)
    w1 = glorot(k_w1, (in_channels, hidden))
    b1 = jnp.zeros((1, hidden), jnp.float32)
    w2 = glorot(k_w2, (hidden, out_channels))
    b2 = jnp.zeros((1, out_channels), jnp.float32)

    # Fused path (auto-selected at this size) and tiled path (forced) both run.
    out_fused = jax.block_until_ready(gcn_encoder(x, edge_index, w1, b1, w2, b2))
    out_tiled = jax.block_until_ready(
        gcn_encoder(x, edge_index, w1, b1, w2, b2, force_tiled=True))

    # Pure-JAX f32 reference (bf16 compute in the kernel -> loose tolerance).
    adj = normalized_adjacency_padded(edge_index, num_nodes, num_nodes)
    h_ref = jnp.maximum(adj @ (x @ w1) + b1, 0.0)
    out_ref = adj @ (h_ref @ w2) + b2

    assert out_fused.shape == (num_nodes, out_channels)
    assert out_tiled.shape == (num_nodes, out_channels)
    for name, o in (("fused", out_fused), ("tiled", out_tiled)):
        assert jnp.allclose(o, out_ref, atol=5e-2, rtol=5e-2), (
            name, float(jnp.max(jnp.abs(o - out_ref))))

    print("KERNEL_OK")
</pallas_src>

<mosaic_0001>
module attributes {stable_mosaic.version = 11 : i64} {
  func.func @_fused_kernel(%arg0: i32, %arg1: memref<128x128xbf16, #tpu.memory_space<vmem>>, %arg2: memref<128x128xbf16, #tpu.memory_space<vmem>>, %arg3: memref<1x128xf32, #tpu.memory_space<vmem>>, %arg4: memref<128x128xbf16, #tpu.memory_space<vmem>>, %arg5: memref<1x128xf32, #tpu.memory_space<vmem>>, %arg6: memref<128x128xf32, #tpu.memory_space<vmem>>) attributes {dimension_semantics = [#tpu.dimension_semantics<arbitrary>], iteration_bounds = array<i64: 1>, scalar_prefetch = 0 : i64, scratch_operands = 0 : i64, tpu.core_type = #tpu.core_type<tc>, window_params = [{pipeline_mode = #tpu.pipeline_mode<synchronous>, transform_indices = @transform_0, window_bounds = array<i64: 128, 128>}, {pipeline_mode = #tpu.pipeline_mode<synchronous>, transform_indices = @transform_1, window_bounds = array<i64: 128, 128>}, {pipeline_mode = #tpu.pipeline_mode<synchronous>, transform_indices = @transform_2, window_bounds = array<i64: 1, 128>}, {pipeline_mode = #tpu.pipeline_mode<synchronous>, transform_indices = @transform_3, window_bounds = array<i64: 128, 128>}, {pipeline_mode = #tpu.pipeline_mode<synchronous>, transform_indices = @transform_4, window_bounds = array<i64: 1, 128>}, {pipeline_mode = #tpu.pipeline_mode<synchronous>, transform_indices = @transform_5, window_bounds = array<i64: 128, 128>}]} {
    %c0 = arith.constant 0 : index
    %c0_0 = arith.constant 0 : index
    %0 = vector.load %arg1[%c0, %c0_0] : memref<128x128xbf16, #tpu.memory_space<vmem>>, vector<128x128xbf16>
    %c0_1 = arith.constant 0 : index
    %c0_2 = arith.constant 0 : index
    %1 = vector.load %arg2[%c0_1, %c0_2] : memref<128x128xbf16, #tpu.memory_space<vmem>>, vector<128x128xbf16>
    %cst = arith.constant dense<0.000000e+00> : vector<128x128xf32>
    %2 = tpu.matmul %0, %1, %cst {dimension_numbers = #tpu.dot_dimension_numbers<[1], [0], [0], [1], [0, 0, 1, 1], [], []>} : vector<128x128xbf16>, vector<128x128xbf16>, vector<128x128xf32> -> vector<128x128xf32>
    %c0_3 = arith.constant 0 : index
    %c0_4 = arith.constant 0 : index
    %3 = vector.load %arg3[%c0_3, %c0_4] : memref<1x128xf32, #tpu.memory_space<vmem>>, vector<1x128xf32>
    %4 = vector.broadcast %3 : vector<1x128xf32> to vector<128x128xf32>
    %5 = arith.addf %2, %4 : vector<128x128xf32>
    %cst_5 = arith.constant 0.000000e+00 : f32
    %6 = vector.broadcast %cst_5 : f32 to vector<128x128xf32>
    %7 = arith.maximumf %5, %6 : vector<128x128xf32>
    %8 = arith.truncf %7 : vector<128x128xf32> to vector<128x128xbf16>
    %c0_6 = arith.constant 0 : index
    %c0_7 = arith.constant 0 : index
    %9 = vector.load %arg4[%c0_6, %c0_7] : memref<128x128xbf16, #tpu.memory_space<vmem>>, vector<128x128xbf16>
    %cst_8 = arith.constant dense<0.000000e+00> : vector<128x128xf32>
    %10 = tpu.matmul %8, %9, %cst_8 {dimension_numbers = #tpu.dot_dimension_numbers<[1], [0], [0], [1], [0, 0, 1, 1], [], []>} : vector<128x128xbf16>, vector<128x128xbf16>, vector<128x128xf32> -> vector<128x128xf32>
    %11 = arith.truncf %10 : vector<128x128xf32> to vector<128x128xbf16>
    %cst_9 = arith.constant dense<0.000000e+00> : vector<128x128xf32>
    %12 = tpu.matmul %0, %11, %cst_9 {dimension_numbers = #tpu.dot_dimension_numbers<[1], [0], [0], [1], [0, 0, 1, 1], [], []>} : vector<128x128xbf16>, vector<128x128xbf16>, vector<128x128xf32> -> vector<128x128xf32>
    %c0_10 = arith.constant 0 : index
    %c0_11 = arith.constant 0 : index
    %13 = vector.load %arg5[%c0_10, %c0_11] : memref<1x128xf32, #tpu.memory_space<vmem>>, vector<1x128xf32>
    %14 = vector.broadcast %13 : vector<1x128xf32> to vector<128x128xf32>
    %15 = arith.addf %12, %14 : vector<128x128xf32>
    %c0_12 = arith.constant 0 : index
    %c0_13 = arith.constant 0 : index
    %16 = vector.load %arg6[%c0_12, %c0_13] : memref<128x128xf32, #tpu.memory_space<vmem>>, vector<128x128xf32>
    tpu.vector_store %arg6[%c0_12, %c0_13], %15 {strides = array<i32>} : memref<128x128xf32, #tpu.memory_space<vmem>>, vector<128x128xf32>,
    return
  }
  func.func @transform_0(%arg0: i32) -> (i32, i32) {
    %c0_i32 = arith.constant 0 : i32
    %c0_i32_0 = arith.constant 0 : i32
    %c0_i32_1 = arith.constant 0 : i32
    return %c0_i32, %c0_i32_0 : i32, i32
  }
  func.func @transform_1(%arg0: i32) -> (i32, i32) {
    %c0_i32 = arith.constant 0 : i32
    %c0_i32_0 = arith.constant 0 : i32
    %c0_i32_1 = arith.constant 0 : i32
    return %c0_i32, %c0_i32_0 : i32, i32
  }
  func.func @transform_2(%arg0: i32) -> (i32, i32) {
    %c0_i32 = arith.constant 0 : i32
    %c0_i32_0 = arith.constant 0 : i32
    %c0_i32_1 = arith.constant 0 : i32
    return %c0_i32, %c0_i32_0 : i32, i32
  }
  func.func @transform_3(%arg0: i32) -> (i32, i32) {
    %c0_i32 = arith.constant 0 : i32
    %c0_i32_0 = arith.constant 0 : i32
    %c0_i32_1 = arith.constant 0 : i32
    return %c0_i32, %c0_i32_0 : i32, i32
  }
  func.func @transform_4(%arg0: i32) -> (i32, i32) {
    %c0_i32 = arith.constant 0 : i32
    %c0_i32_0 = arith.constant 0 : i32
    %c0_i32_1 = arith.constant 0 : i32
    return %c0_i32, %c0_i32_0 : i32, i32
  }
  func.func @transform_5(%arg0: i32) -> (i32, i32) {
    %c0_i32 = arith.constant 0 : i32
    %c0_i32_0 = arith.constant 0 : i32
    %c0_i32_1 = arith.constant 0 : i32
    return %c0_i32, %c0_i32_0 : i32, i32
  }
}

</mosaic_0001>

<llo_original>
// kernel: tpu_custom_call.1
$region0: #{tpu_custom_call.1}
  #allocation0 [shape = 'u32[]', space=smem, size = 0x4, offset = 0x4, fixed_abs, tag = 'smem constant byte address 0x4 - core index']
  #allocation1 [shape = 'u32[72,128]{1,0:T(1,128)}', space=vmem, size = 0x9000, scoped, tag = 'internal scratch']
  %s0 = inlined_call_operand.hbm [shape: bf16[128,128], index: 0, kind: input, shape index: {}]
  %s1 = inlined_call_operand.hbm [shape: bf16[128,128], index: 1, kind: input, shape index: {}]
  %s2 = inlined_call_operand.vmem [shape: f32[1,128], index: 2, kind: input, shape index: {}]
  %s3 = inlined_call_operand.hbm [shape: bf16[128,128], index: 3, kind: input, shape index: {}]
  %s4 = inlined_call_operand.vmem [shape: f32[1,128], index: 4, kind: input, shape index: {}]
  %s5 = inlined_call_operand.hbm [shape: f32[128,128], index: 5, kind: output, shape index: {}]
  %s6 = sld [smem:[#allocation0]]
  $region42: #{tpu_custom_call.1} parent=0
    _
  %s8 = ssub.s32 1, %s6
  %s9 = scalar_select 0, %s8, %s6
  $region1: #{tpu_custom_call.1} parent=0
    #allocation2 [shape = 'u8[32768]{0}', space=vmem, size = 0x8000, scoped, tag = 'input window, operand 0, single buffered']
    #allocation3 [shape = 's32[1]{0}', space=sflag, size = 0x4, scoped, tag = 'scoped memory for tpu_custom_call.1']
    #allocation4 [shape = 's32[1]{0}', space=sflag, size = 0x4, scoped, tag = 'scoped memory for tpu_custom_call.1']
    #allocation5 [shape = 'u8[32768]{0}', space=vmem, size = 0x8000, scoped, tag = 'input window, operand 1, single buffered']
    #allocation6 [shape = 's32[1]{0}', space=sflag, size = 0x4, scoped, tag = 'scoped memory for tpu_custom_call.1']
    #allocation7 [shape = 'u8[32768]{0}', space=vmem, size = 0x8000, scoped, tag = 'input window, operand 3, single buffered']
    #allocation8 [shape = 'u8[65536]{0}', space=vmem, size = 0x10000, scoped, tag = 'output window, operand 0, single buffered']
    %10 = vsyncpa [#allocation3], 0
    %11 = vsyncpa [#allocation6], 0
    %12 = vsyncpa [#allocation4], 0
    // Predicated region
    $region2: #{tpu_custom_call.1} parent=1 // pred_check
      _
    $region3: #{tpu_custom_call.1} parent=1 // pred_check_branch
      %14 = sbr.rel (0) target = $region5
    $region4: #{tpu_custom_call.1} parent=1 // pred_region
      %16 = vsyncadd [#allocation3], 0
      %s17 = sshll.u32 %s0, 4
      %s18 = int_to_ptr.hbm [resolvable:$true] %s17
      %s19 = sshll.u32 [#allocation2], 4
      %s20 = int_to_ptr.vmem [resolvable:$true] %s19
      %25 = dma.hbm_to_vmem [thread:$0]  %s18, 1024, %s20, [#allocation3], 64, 64, 4
    $region5: #{tpu_custom_call.1} parent=1 // pred_fallthru
      _
    // Predicated region
    $region6: #{tpu_custom_call.1} parent=1 // pred_check
      _
    $region7: #{tpu_custom_call.1} parent=1 // pred_check_branch
      %27 = sbr.rel (0) target = $region9
    $region8: #{tpu_custom_call.1} parent=1 // pred_region
      %29 = vsyncadd [#allocation6], 0
      %s30 = sshll.u32 %s1, 4
      %s31 = int_to_ptr.hbm [resolvable:$true] %s30
      %s32 = sshll.u32 [#allocation5], 4
      %s33 = int_to_ptr.vmem [resolvable:$true] %s32
      %38 = dma.hbm_to_vmem [thread:$0]  %s31, 1024, %s33, [#allocation6], 64, 64, 4
    $region9: #{tpu_custom_call.1} parent=1 // pred_fallthru
      _
    // Predicated region
    $region10: #{tpu_custom_call.1} parent=1 // pred_check
      _
    $region11: #{tpu_custom_call.1} parent=1 // pred_check_branch
      %40 = sbr.rel (0) target = $region13
    $region12: #{tpu_custom_call.1} parent=1 // pred_region
      _
    $region13: #{tpu_custom_call.1} parent=1 // pred_fallthru
      _
    // Predicated region
    $region14: #{tpu_custom_call.1} parent=1 // pred_check
      _
    $region15: #{tpu_custom_call.1} parent=1 // pred_check_branch
      %42 = sbr.rel (0) target = $region17
    $region16: #{tpu_custom_call.1} parent=1 // pred_region
      %44 = vsyncadd [#allocation6], 0
      %s45 = sshll.u32 %s3, 4
      %s46 = int_to_ptr.hbm [resolvable:$true] %s45
      %s47 = sshll.u32 [#allocation7], 4
      %s48 = int_to_ptr.vmem [resolvable:$true] %s47
      %53 = dma.hbm_to_vmem [thread:$0]  %s46, 1024, %s48, [#allocation6], 64, 64, 4
    $region17: #{tpu_custom_call.1} parent=1 // pred_fallthru
      _
    // Predicated region
    $region18: #{tpu_custom_call.1} parent=1 // pred_check
      _
    $region19: #{tpu_custom_call.1} parent=1 // pred_check_branch
      %55 = sbr.rel (0) target = $region21
    $region20: #{tpu_custom_call.1} parent=1 // pred_region
      _
    $region21: #{tpu_custom_call.1} parent=1 // pred_fallthru
      _
    // Predicated region
    $region22: #{tpu_custom_call.1} parent=1 // pred_check
      _
    $region23: #{tpu_custom_call.1} parent=1 // pred_check_branch
      %57 = sbr.rel (0) target = $region25
    $region24: #{tpu_custom_call.1} parent=1 // pred_region
      %59 = dma.done [#allocation3], 1024
    $region25: #{tpu_custom_call.1} parent=1 // pred_fallthru
      _
    // Predicated region
    $region26: #{tpu_custom_call.1} parent=1 // pred_check
      _
    $region27: #{tpu_custom_call.1} parent=1 // pred_check_branch
      %61 = sbr.rel (0) target = $region29
    $region28: #{tpu_custom_call.1} parent=1 // pred_region
      %63 = dma.done [#allocation6], 1024
    $region29: #{tpu_custom_call.1} parent=1 // pred_fallthru
      _
    // Predicated region
    $region30: #{tpu_custom_call.1} parent=1 // pred_check
      _
    $region31: #{tpu_custom_call.1} parent=1 // pred_check_branch
      %65 = sbr.rel (0) target = $region33
    $region32: #{tpu_custom_call.1} parent=1 // pred_region
      %67 = dma.done [#allocation6], 1024
    $region33: #{tpu_custom_call.1} parent=1 // pred_fallthru
      _
    %v68 = vld [vmem:[#allocation2] sm:$0xf]
    %v69 = vld [vmem:[#allocation2 + $0x4] sm:$0xf]
    %v70 = vld [vmem:[#allocation2 + $0x8] sm:$0xf]
    %v71 = vld [vmem:[#allocation2 + $0xc] sm:$0xf]
    %v72 = vld [vmem:[#allocation2 + $0x10] sm:$0xf]
    %v73 = vld [vmem:[#allocation2 + $0x14] sm:$0xf]
    %v74 = vld [vmem:[#allocation2 + $0x18] sm:$0xf]
    %v75 = vld [vmem:[#allocation2 + $0x1c] sm:$0xf]
    %v76 = vld [vmem:[#allocation2 + $0x20] sm:$0xf]
    %v77 = vld [vmem:[#allocation2 + $0x24] sm:$0xf]
    %v78 = vld [vmem:[#allocation2 + $0x28] sm:$0xf]
    %v79 = vld [vmem:[#allocation2 + $0x2c] sm:$0xf]
    %v80 = vld [vmem:[#allocation2 + $0x30] sm:$0xf]
    %v81 = vld [vmem:[#allocation2 + $0x34] sm:$0xf]
    %v82 = vld [vmem:[#allocation2 + $0x38] sm:$0xf]
    %v83 = vld [vmem:[#allocation2 + $0x3c] sm:$0xf]
    %v84 = vld [vmem:[#allocation5] sm:$0xf]
    %v85 = vld [vmem:[#allocation5 + $0x4] sm:$0xf]
    %v86 = vld [vmem:[#allocation5 + $0x8] sm:$0xf]
    %v87 = vld [vmem:[#allocation5 + $0xc] sm:$0xf]
    %v88 = vld [vmem:[#allocation5 + $0x10] sm:$0xf]
    %v89 = vld [vmem:[#allocation5 + $0x14] sm:$0xf]
    %v90 = vld [vmem:[#allocation5 + $0x18] sm:$0xf]
    %v91 = vld [vmem:[#allocation5 + $0x1c] sm:$0xf]
    %v92 = vld [vmem:[#allocation5 + $0x20] sm:$0xf]
    %v93 = vld [vmem:[#allocation5 + $0x24] sm:$0xf]
    %v94 = vld [vmem:[#allocation5 + $0x28] sm:$0xf]
    %v95 = vld [vmem:[#allocation5 + $0x2c] sm:$0xf]
    %v96 = vld [vmem:[#allocation5 + $0x30] sm:$0xf]
    %v97 = vld [vmem:[#allocation5 + $0x34] sm:$0xf]
    %v98 = vld [vmem:[#allocation5 + $0x38] sm:$0xf]
    %v99 = vld [vmem:[#allocation5 + $0x3c] sm:$0xf]
    %v100 = vld [vmem:[%s2] sm:$0x1]
    %v102 = vperm.slane %v100, 0
    %v120 = vunpack.c.l.b16 %v68
    %v121 = vunpack.c.l.b16 %v69
    %v122 = vunpack.c.l.b16 %v70
    %v123 = vunpack.c.l.b16 %v71
    %v124 = vunpack.c.l.b16 %v72
    %v125 = vunpack.c.l.b16 %v73
    %v126 = vunpack.c.l.b16 %v74
    %v127 = vunpack.c.l.b16 %v75
    %v128 = vunpack.c.l.b16 %v76
    %v129 = vunpack.c.l.b16 %v77
    %v130 = vunpack.c.l.b16 %v78
    %v131 = vunpack.c.l.b16 %v79
    %v132 = vunpack.c.l.b16 %v80
    %v133 = vunpack.c.l.b16 %v81
    %v134 = vunpack.c.l.b16 %v82
    %v135 = vunpack.c.l.b16 %v83
    %v136 = vpack.c.b16 %v121, %v120
    %v137 = vpack.c.b16 %v123, %v122
    %v138 = vpack.c.b16 %v125, %v124
    %v139 = vpack.c.b16 %v127, %v126
    %v140 = vpack.c.b16 %v129, %v128
    %v141 = vpack.c.b16 %v131, %v130
    %v142 = vpack.c.b16 %v133, %v132
    %v143 = vpack.c.b16 %v135, %v134
    %v168 = vunpack.c.l.b16 %v84
    %v169 = vunpack.c.l.b16 %v85
    %v170 = vunpack.c.l.b16 %v86
    %v171 = vunpack.c.l.b16 %v87
    %v172 = vunpack.c.l.b16 %v88
    %v173 = vunpack.c.l.b16 %v89
    %v174 = vunpack.c.l.b16 %v90
    %v175 = vunpack.c.l.b16 %v91
    %v176 = vunpack.c.l.b16 %v92
    %v177 = vunpack.c.l.b16 %v93
    %v178 = vunpack.c.l.b16 %v94
    %v179 = vunpack.c.l.b16 %v95
    %v180 = vunpack.c.l.b16 %v96
    %v181 = vunpack.c.l.b16 %v97
    %v182 = vunpack.c.l.b16 %v98
    %v183 = vunpack.c.l.b16 %v99
    %v184 = vpack.c.b16 %v169, %v168
    %v185 = vpack.c.b16 %v171, %v170
    %v186 = vpack.c.b16 %v173, %v172
    %v187 = vpack.c.b16 %v175, %v174
    %v188 = vpack.c.b16 %v177, %v176
    %v189 = vpack.c.b16 %v179, %v178
    %v190 = vpack.c.b16 %v181, %v180
    %v191 = vpack.c.b16 %v183, %v182
    %200 = vmatpush.bf16.msra.mxu0 %v191
    %201 = vmatpush.bf16.msra.mxu0 %v190
    %202 = vmatpush.bf16.msra.mxu0 %v189
    %203 = vmatpush.bf16.msra.mxu0 %v188
    %204 = vmatpush.bf16.msra.mxu0 %v187
    %205 = vmatpush.bf16.msra.mxu0 %v186
    %206 = vmatpush.bf16.msra.mxu0 %v185
    %207 = vmatpush.bf16.msra.mxu0 %v184
    %208 = vmatmul.bf16.gmra.mxu0 %v136
    %v209 = vpop.f32.mrf.mxu0
    %v210 = vadd.f32 %v102, %v209
    %v211 = vpop.f32.mrf.mxu0
    %v212 = vadd.f32 %v102, %v211
    %213 = vmatmul.bf16.gmra.mxu0 %v137
    %v214 = vpop.f32.mrf.mxu0
    %v215 = vadd.f32 %v102, %v214
    %v216 = vpop.f32.mrf.mxu0
    %v217 = vadd.f32 %v102, %v216
    %218 = vmatmul.bf16.gmra.mxu0 %v138
    %v219 = vpop.f32.mrf.mxu0
    %v220 = vadd.f32 %v102, %v219
    %v221 = vpop.f32.mrf.mxu0
    %v222 = vadd.f32 %v102, %v221
    %223 = vmatmul.bf16.gmra.mxu0 %v139
    %v224 = vpop.f32.mrf.mxu0
    %v225 = vadd.f32 %v102, %v224
    %v226 = vpop.f32.mrf.mxu0
    %v227 = vadd.f32 %v102, %v226
    %228 = vmatmul.bf16.gmra.mxu0 %v140
    %v229 = vpop.f32.mrf.mxu0
    %v230 = vadd.f32 %v102, %v229
    %v231 = vpop.f32.mrf.mxu0
    %v232 = vadd.f32 %v102, %v231
    %233 = vmatmul.bf16.gmra.mxu0 %v141
    %v234 = vpop.f32.mrf.mxu0
    %v235 = vadd.f32 %v102, %v234
    %v236 = vpop.f32.mrf.mxu0
    %v237 = vadd.f32 %v102, %v236
    %238 = vmatmul.bf16.gmra.mxu0 %v142
    %v239 = vpop.f32.mrf.mxu0
    %v240 = vadd.f32 %v102, %v239
    %v241 = vpop.f32.mrf.mxu0
    %v242 = vadd.f32 %v102, %v241
    %243 = vmatmul.bf16.gmra.mxu0 %v143
    %v244 = vpop.f32.mrf.mxu0
    %v245 = vadd.f32 %v102, %v244
    %v246 = vpop.f32.mrf.mxu0
    %v247 = vadd.f32 %v102, %v246
    %248 = vdwg.mxu0
    %v249 = vmax.f32 %v210, 0.0
    %v250 = vmax.f32 %v212, 0.0
    %v251 = vmax.f32 %v215, 0.0
    %v252 = vmax.f32 %v217, 0.0
    %v253 = vmax.f32 %v220, 0.0
    %v254 = vmax.f32 %v222, 0.0
    %v255 = vmax.f32 %v225, 0.0
    %v256 = vmax.f32 %v227, 0.0
    %v257 = vmax.f32 %v230, 0.0
    %v258 = vmax.f32 %v232, 0.0
    %v259 = vmax.f32 %v235, 0.0
    %v260 = vmax.f32 %v237, 0.0
    %v261 = vmax.f32 %v240, 0.0
    %v262 = vmax.f32 %v242, 0.0
    %v263 = vmax.f32 %v245, 0.0
    %v264 = vmax.f32 %v247, 0.0
    %v265 = vpack.c.bf16 %v250, %v249
    %v266 = vpack.c.bf16 %v252, %v251
    %v267 = vpack.c.bf16 %v254, %v253
    %v268 = vpack.c.bf16 %v256, %v255
    %v269 = vpack.c.bf16 %v258, %v257
    %v270 = vpack.c.bf16 %v260, %v259
    %v271 = vpack.c.bf16 %v262, %v261
    %v272 = vpack.c.bf16 %v264, %v263
    %v273 = vld [vmem:[#allocation7] sm:$0xf]
    %v274 = vld [vmem:[#allocation7 + $0x4] sm:$0xf]
    %v275 = vld [vmem:[#allocation7 + $0x8] sm:$0xf]
    %v276 = vld [vmem:[#allocation7 + $0xc] sm:$0xf]
    %v277 = vld [vmem:[#allocation7 + $0x10] sm:$0xf]
    %v278 = vld [vmem:[#allocation7 + $0x14] sm:$0xf]
    %v279 = vld [vmem:[#allocation7 + $0x18] sm:$0xf]
    %v280 = vld [vmem:[#allocation7 + $0x1c] sm:$0xf]
    %v281 = vld [vmem:[#allocation7 + $0x20] sm:$0xf]
    %v282 = vld [vmem:[#allocation7 + $0x24] sm:$0xf]
    %v283 = vld [vmem:[#allocation7 + $0x28] sm:$0xf]
    %v284 = vld [vmem:[#allocation7 + $0x2c] sm:$0xf]
    %v285 = vld [vmem:[#allocation7 + $0x30] sm:$0xf]
    %v286 = vld [vmem:[#allocation7 + $0x34] sm:$0xf]
    %v287 = vld [vmem:[#allocation7 + $0x38] sm:$0xf]
    %v288 = vld [vmem:[#allocation7 + $0x3c] sm:$0xf]
    %v305 = vunpack.c.l.b16 %v273
    %v306 = vunpack.c.l.b16 %v274
    %v307 = vunpack.c.l.b16 %v275
    %v308 = vunpack.c.l.b16 %v276
    %v309 = vunpack.c.l.b16 %v277
    %v310 = vunpack.c.l.b16 %v278
    %v311 = vunpack.c.l.b16 %v279
    %v312 = vunpack.c.l.b16 %v280
    %v313 = vunpack.c.l.b16 %v281
    %v314 = vunpack.c.l.b16 %v282
    %v315 = vunpack.c.l.b16 %v283
    %v316 = vunpack.c.l.b16 %v284
    %v317 = vunpack.c.l.b16 %v285
    %v318 = vunpack.c.l.b16 %v286
    %v319 = vunpack.c.l.b16 %v287
    %v320 = vunpack.c.l.b16 %v288
    %v321 = vpack.c.b16 %v306, %v305
    %v322 = vpack.c.b16 %v308, %v307
    %v323 = vpack.c.b16 %v310, %v309
    %v324 = vpack.c.b16 %v312, %v311
    %v325 = vpack.c.b16 %v314, %v313
    %v326 = vpack.c.b16 %v316, %v315
    %v327 = vpack.c.b16 %v318, %v317
    %v328 = vpack.c.b16 %v320, %v319
    %337 = vmatpush.bf16.msra.mxu0 %v328
    %338 = vmatpush.bf16.msra.mxu0 %v327
    %339 = vmatpush.bf16.msra.mxu0 %v326
    %340 = vmatpush.bf16.msra.mxu0 %v325
    %341 = vmatpush.bf16.msra.mxu0 %v324
    %342 = vmatpush.bf16.msra.mxu0 %v323
    %343 = vmatpush.bf16.msra.mxu0 %v322
    %344 = vmatpush.bf16.msra.mxu0 %v321
    %345 = vmatmul.bf16.gmra.mxu0 %v265
    %v346 = vpop.f32.mrf.mxu0
    %v347 = vadd.f32 0.0, %v346
    %v348 = vpop.f32.mrf.mxu0
    %v349 = vadd.f32 0.0, %v348
    %350 = vmatmul.bf16.gmra.mxu0 %v266
    %v351 = vpop.f32.mrf.mxu0
    %v352 = vadd.f32 0.0, %v351
    %v353 = vpop.f32.mrf.mxu0
    %v354 = vadd.f32 0.0, %v353
    %355 = vmatmul.bf16.gmra.mxu0 %v267
    %v356 = vpop.f32.mrf.mxu0
    %v357 = vadd.f32 0.0, %v356
    %v358 = vpop.f32.mrf.mxu0
    %v359 = vadd.f32 0.0, %v358
    %360 = vmatmul.bf16.gmra.mxu0 %v268
    %v361 = vpop.f32.mrf.mxu0
    %v362 = vadd.f32 0.0, %v361
    %v363 = vpop.f32.mrf.mxu0
    %v364 = vadd.f32 0.0, %v363
    %365 = vmatmul.bf16.gmra.mxu0 %v269
    %v366 = vpop.f32.mrf.mxu0
    %v367 = vadd.f32 0.0, %v366
    %v368 = vpop.f32.mrf.mxu0
    %v369 = vadd.f32 0.0, %v368
    %370 = vmatmul.bf16.gmra.mxu0 %v270
    %v371 = vpop.f32.mrf.mxu0
    %v372 = vadd.f32 0.0, %v371
    %v373 = vpop.f32.mrf.mxu0
    %v374 = vadd.f32 0.0, %v373
    %375 = vmatmul.bf16.gmra.mxu0 %v271
    %v376 = vpop.f32.mrf.mxu0
    %v377 = vadd.f32 0.0, %v376
    %v378 = vpop.f32.mrf.mxu0
    %v379 = vadd.f32 0.0, %v378
    %380 = vmatmul.bf16.gmra.mxu0 %v272
    %v381 = vpop.f32.mrf.mxu0
    %v382 = vadd.f32 0.0, %v381
    %v383 = vpop.f32.mrf.mxu0
    %v384 = vadd.f32 0.0, %v383
    %385 = vdwg.mxu0
    %v386 = vpack.c.bf16 %v349, %v347
    %v387 = vpack.c.bf16 %v354, %v352
    %v388 = vpack.c.bf16 %v359, %v357
    %v389 = vpack.c.bf16 %v364, %v362
    %v390 = vpack.c.bf16 %v369, %v367
    %v391 = vpack.c.bf16 %v374, %v372
    %v392 = vpack.c.bf16 %v379, %v377
    %v393 = vpack.c.bf16 %v384, %v382
    %v394 = vld [vmem:[%s4] sm:$0x1]
    %v396 = vperm.slane %v394, 0
    %398 = vmatpush.bf16.msra.mxu0 %v393
    %399 = vmatpush.bf16.msra.mxu0 %v392
    %400 = vmatpush.bf16.msra.mxu0 %v391
    %401 = vmatpush.bf16.msra.mxu0 %v390
    %402 = vmatpush.bf16.msra.mxu0 %v389
    %403 = vmatpush.bf16.msra.mxu0 %v388
    %404 = vmatpush.bf16.msra.mxu0 %v387
    %405 = vmatpush.bf16.msra.mxu0 %v386
    %406 = vmatmul.bf16.gmra.mxu0 %v136
    %v407 = vpop.f32.mrf.mxu0
    %v408 = vadd.f32 %v396, %v407
    %v409 = vpop.f32.mrf.mxu0
    %v410 = vadd.f32 %v396, %v409
    %411 = vmatmul.bf16.gmra.mxu0 %v137
    %v412 = vpop.f32.mrf.mxu0
    %v413 = vadd.f32 %v396, %v412
    %v414 = vpop.f32.mrf.mxu0
    %v415 = vadd.f32 %v396, %v414
    %416 = vmatmul.bf16.gmra.mxu0 %v138
    %v417 = vpop.f32.mrf.mxu0
    %v418 = vadd.f32 %v396, %v417
    %v419 = vpop.f32.mrf.mxu0
    %v420 = vadd.f32 %v396, %v419
    %421 = vmatmul.bf16.gmra.mxu0 %v139
    %v422 = vpop.f32.mrf.mxu0
    %v423 = vadd.f32 %v396, %v422
    %v424 = vpop.f32.mrf.mxu0
    %v425 = vadd.f32 %v396, %v424
    %426 = vmatmul.bf16.gmra.mxu0 %v140
    %v427 = vpop.f32.mrf.mxu0
    %v428 = vadd.f32 %v396, %v427
    %v429 = vpop.f32.mrf.mxu0
    %v430 = vadd.f32 %v396, %v429
    %431 = vmatmul.bf16.gmra.mxu0 %v141
    %v432 = vpop.f32.mrf.mxu0
    %v433 = vadd.f32 %v396, %v432
    %v434 = vpop.f32.mrf.mxu0
    %v435 = vadd.f32 %v396, %v434
    %436 = vmatmul.bf16.gmra.mxu0 %v142
    %v437 = vpop.f32.mrf.mxu0
    %v438 = vadd.f32 %v396, %v437
    %v439 = vpop.f32.mrf.mxu0
    %v440 = vadd.f32 %v396, %v439
    %441 = vmatmul.bf16.gmra.mxu0 %v143
    %v442 = vpop.f32.mrf.mxu0
    %v443 = vadd.f32 %v396, %v442
    %v444 = vpop.f32.mrf.mxu0
    %v445 = vadd.f32 %v396, %v444
    %446 = vdwg.mxu0
    %447 = vst [vmem:[#allocation8] sm:$0xff] %v408
    %448 = vst [vmem:[#allocation8 + $0x8] sm:$0xff] %v410
    %449 = vst [vmem:[#allocation8 + $0x10] sm:$0xff] %v413
    %450 = vst [vmem:[#allocation8 + $0x18] sm:$0xff] %v415
    %451 = vst [vmem:[#allocation8 + $0x20] sm:$0xff] %v418
    %452 = vst [vmem:[#allocation8 + $0x28] sm:$0xff] %v420
    %453 = vst [vmem:[#allocation8 + $0x30] sm:$0xff] %v423
    %454 = vst [vmem:[#allocation8 + $0x38] sm:$0xff] %v425
    %455 = vst [vmem:[#allocation8 + $0x40] sm:$0xff] %v428
    %456 = vst [vmem:[#allocation8 + $0x48] sm:$0xff] %v430
    %457 = vst [vmem:[#allocation8 + $0x50] sm:$0xff] %v433
    %458 = vst [vmem:[#allocation8 + $0x58] sm:$0xff] %v435
    %459 = vst [vmem:[#allocation8 + $0x60] sm:$0xff] %v438
    %460 = vst [vmem:[#allocation8 + $0x68] sm:$0xff] %v440
    %461 = vst [vmem:[#allocation8 + $0x70] sm:$0xff] %v443
    %462 = vst [vmem:[#allocation8 + $0x78] sm:$0xff] %v445
    // Predicated region
    $region34: #{tpu_custom_call.1} parent=1 // pred_check
      _
    $region35: #{tpu_custom_call.1} parent=1 // pred_check_branch
      %464 = sbr.rel (0) target = $region37
    $region36: #{tpu_custom_call.1} parent=1 // pred_region
      %466 = vsyncadd [#allocation4], 0
      %s467 = sshll.u32 [#allocation8], 4
      %s468 = int_to_ptr.vmem [resolvable:$true] %s467
      %s469 = sshll.u32 %s5, 4
      %s470 = int_to_ptr.hbm [resolvable:$true] %s469
      %475 = dma.vmem_to_hbm [thread:$0]  %s468, 2048, %s470, [#allocation4], 128, 128, 8
    $region37: #{tpu_custom_call.1} parent=1 // pred_fallthru
      _
    // Predicated region
    $region38: #{tpu_custom_call.1} parent=1 // pred_check
      _
    $region39: #{tpu_custom_call.1} parent=1 // pred_check_branch
      %477 = sbr.rel (0) target = $region41
    $region40: #{tpu_custom_call.1} parent=1 // pred_region
      %479 = dma.done [#allocation4], 2048
    $region41: #{tpu_custom_call.1} parent=1 // pred_fallthru
      _
    %480 = vsyncpa [#allocation3], 1
    %481 = vsyncpa [#allocation6], 1
    %482 = vsyncpa [#allocation4], 1

</llo_original>
